<compile_context>
chip_gen: v7x
topology: tpu7x:2x2x1
jax: 0.10.0
libtpu: 0.0.40
codegen_flags: <defaults>
</compile_context>

<pallas_src>
import functools
import math

import jax
import jax.numpy as jnp
from jax.experimental import pallas as pl
from jax.experimental.pallas import tpu as pltpu


# --------------------------------------------------------------------------
# Fused kernel: diffusion powers + folded projection + bias + ReLU, per batch
# --------------------------------------------------------------------------
def _dgcn_fused_kernel(x0_ref, adj_ref, w_ref, b_ref, o_ref, *, orders):
    """Per-batch fused D_GCN forward.

    x0_ref  : (1, N, T*F)        bf16  node features, channel order (t, f)
    adj_ref : (1, 3, N, N)       bf16  packed [A_q, A_h, adpt] random-walk matrices
    w_ref   : (Meff, T*F, T*O)   bf16  folded block-diagonal projection weights, slot order
                                       [identity, Aq^1..Aq^ord, Ah^1..Ah^ord, Ad^1..Ad^ord]
    b_ref   : (1, T*O)           f32   folded bias, tiled over time
    o_ref   : (1, N, T*O)        f32   lane-dense output block
    """
    x0 = x0_ref[0]
    bias = b_ref[...]

    def proj(x_b, slot):
        # (N, T*F) @ (T*F, T*O) -> (N, T*O), f32 accumulation on the MXU
        return jnp.dot(x_b, w_ref[slot], preferred_element_type=jnp.float32)

    # identity slot (shared by the (A_q, A_h) path and the adaptive path; weights folded)
    acc = proj(x0, 0)

    # Interleave the three independent diffusion chains order-by-order so several independent
    # MXU pushes are in flight instead of one serial tiny-matmul chain.
    adjs = [adj_ref[0, 0], adj_ref[0, 1], adj_ref[0, 2]]
    chains = [x0, x0, x0]
    for k in range(1, orders + 1):          # static python loop: orders is compile-time
        nxt = []
        for c in range(3):
            xk = jnp.dot(adjs[c], chains[c],
                         preferred_element_type=jnp.float32).astype(x0.dtype)
            acc = acc + proj(xk, 1 + c * orders + (k - 1))
            nxt.append(xk)
        chains = nxt

    # Epilogue in f32 (v5e has no bf16 VPU path), ReLU activation.
    o_ref[0] = jnp.maximum(acc + bias, 0.0)


# --------------------------------------------------------------------------
# Wrapper: weight folding + layout glue + pallas_call
# --------------------------------------------------------------------------
def _fold_params(params, F_in, T, orders):
    """Fold Theta1/Theta2/bias/fusion into per-diffusion-slot block-diagonal weights."""
    Th1, b1, Th2, b2, Wf, bf = params
    M = 2 * orders + 1
    O = Th1.shape[1]

    # Linear algebra fold: out = relu(x_feat @ Wx + xa_feat @ Wxa + b_all)
    Wx = Th1 @ Wf[0:O]                                     # (K, O)
    Wxa = Th1 @ Wf[O:2 * O] + Th2 @ Wf[2 * O:3 * O]        # (K, O)
    b_all = b1 @ Wf[0:O] + b1 @ Wf[O:2 * O] + b2 @ Wf[2 * O:3 * O] + bf   # (1, O)

    # Feature index in the reference is f*M + m  ->  per-slot weights (M, F, O)
    Wx_s = jnp.transpose(Wx.reshape(F_in, M, O), (1, 0, 2))
    Wxa_s = jnp.transpose(Wxa.reshape(F_in, M, O), (1, 0, 2))

    # Dedupe: the adaptive stack repeats its power series, and both stacks share the x0 slot.
    w_id = Wx_s[0] + Wxa_s[0]                                         # identity slot
    w_q = Wx_s[1:orders + 1]                                          # A_q powers
    w_h = Wx_s[orders + 1:2 * orders + 1]                             # A_h powers
    w_a = Wxa_s[1:orders + 1] + Wxa_s[orders + 1:2 * orders + 1]      # adpt powers (deduped)
    W_eff = jnp.concatenate([w_id[None], w_q, w_h, w_a], axis=0)      # (3*orders+1, F, O)
    Meff = 3 * orders + 1

    # Block-diagonal expansion over time: W_blk[s, t*F+f, t'*O+o] = (t==t') * W_eff[s, f, o]
    eye_t = jnp.eye(T, dtype=W_eff.dtype)
    W_blk = (eye_t[None, :, None, :, None] * W_eff[:, None, :, None, :]
             ).reshape(Meff, T * F_in, T * O)
    bias_t = jnp.tile(b_all, (1, T))                                   # (1, T*O)
    return W_blk, bias_t


def _d_gcn_forward_impl(X, A_q, A_h, adpt_adj, params, orders):
    B, F_in, T, N = X.shape
    O = params[0].shape[1]
    TF = T * F_in
    TO = T * O
    Meff = 3 * orders + 1

    # Layout glue (tiny tensors): (B, F, T, N) -> (B, N, T*F), channel order (t, f).
    x0 = jnp.transpose(X, (0, 3, 2, 1)).reshape(B, N, TF).astype(jnp.bfloat16)
    # Pack the three random-walk matrices: single DMA per grid step instead of three.
    adj = jnp.stack([A_q, A_h, adpt_adj], axis=1).astype(jnp.bfloat16)   # (B, 3, N, N)

    W_blk, bias_t = _fold_params(params, F_in, T, orders)   # folded in f32
    W_blk = W_blk.astype(jnp.bfloat16)                      # bf16 MXU operand
    bias_t = bias_t.astype(jnp.float32)                     # f32 epilogue

    # NOTE: for large B, multiple batches could be blocked per grid step to amortize the
    # ~0.35us per-step overhead; at B=2 per-batch steps split cleanly across v7x's 2 TCs.
    out = pl.pallas_call(
        functools.partial(_dgcn_fused_kernel, orders=orders),
        out_shape=jax.ShapeDtypeStruct((B, N, TO), jnp.float32),
        grid=(B,),
        in_specs=[
            pl.BlockSpec((1, N, TF), lambda b: (b, 0, 0)),        # x0
            pl.BlockSpec((1, 3, N, N), lambda b: (b, 0, 0, 0)),   # packed adjacencies
            pl.BlockSpec((Meff, TF, TO), lambda b: (0, 0, 0)),    # folded weights (shared)
            pl.BlockSpec((1, TO), lambda b: (0, 0)),              # folded bias (shared)
        ],
        out_specs=pl.BlockSpec((1, N, TO), lambda b: (b, 0, 0)),
        compiler_params=pltpu.CompilerParams(dimension_semantics=("parallel",)),
    )(x0, adj, W_blk, bias_t)

    # (B, N, T*O) -> (B, N, T, O) -> (B, out_features, T, N)  (small final tensor)
    return jnp.transpose(out.reshape(B, N, T, O), (0, 3, 2, 1))


d_gcn_forward = jax.jit(_d_gcn_forward_impl, static_argnums=(5,))


# --------------------------------------------------------------------------
# Deterministic parameter init (mirrors D_GCN.reset_parameters / nn.Linear)
# --------------------------------------------------------------------------
def init_params(key, in_features, out_features, orders):
    M = 2 * orders + 1
    K = in_features * M
    stdv = 1.0 / math.sqrt(out_features)
    stdvf = 1.0 / math.sqrt(3 * out_features)
    k1, k2, k3, k4, k5, k6 = jax.random.split(key, 6)
    Th1 = jax.random.uniform(k1, (K, out_features), jnp.float32, -stdv, stdv)
    b1 = jax.random.uniform(k2, (1, out_features), jnp.float32, -stdv, stdv)
    Th2 = jax.random.uniform(k3, (K, out_features), jnp.float32, -stdv, stdv)
    b2 = jax.random.uniform(k4, (1, out_features), jnp.float32, -stdv, stdv)
    # fusion Linear stored directly as (3*O, O) so y = cat @ Wf + bf
    Wf = jax.random.uniform(k5, (3 * out_features, out_features), jnp.float32, -stdvf, stdvf)
    bf = jax.random.uniform(k6, (1, out_features), jnp.float32, -stdvf, stdvf)
    return Th1, b1, Th2, b2, Wf, bf


# --------------------------------------------------------------------------
# Pure-JAX f32 reference (mirrors the PyTorch forward, unfused / unfolded)
# --------------------------------------------------------------------------
def d_gcn_ref(X, A_q, A_h, adpt_adj, params, orders):
    B, F_in, T, N = X.shape
    M = 2 * orders + 1
    Th1, b1, Th2, b2, Wf, bf = params
    x0 = jnp.transpose(X, (0, 3, 1, 2)).reshape(B, N, F_in * T)

    def diffuse(supports):
        xs = [x0]
        for A in supports:
            x1 = jnp.einsum('bij,bjk->bik', A, x0)
            xs.append(x1)
            for _ in range(2, orders + 1):
                x1 = jnp.einsum('bij,bjk->bik', A, x1)
                xs.append(x1)
        s = jnp.stack(xs, 0).reshape(M, B, N, F_in, T)
        s = jnp.transpose(s, (1, 4, 2, 3, 0))
        return s.reshape(B, T, N, F_in * M)

    x = diffuse((A_q, A_h))
    xa = diffuse((adpt_adj, adpt_adj))
    y = x @ Th1 + b1[0]
    ya1 = xa @ Th1 + b1[0]
    ya2 = xa @ Th2 + b2[0]
    cat = jnp.concatenate([y, ya1, ya2], -1)
    out = jax.nn.relu(cat @ Wf + bf[0])
    return jnp.transpose(out, (0, 3, 1, 2))


if __name__ == "__main__":
    B, F_in, T, N = 2, 4, 8, 16        # batch, in_features, timesteps, nodes
    out_features = 32
    orders = 2

    key = jax.random.PRNGKey(0)
    kx, kq, kh, ka, kp = jax.random.split(key, 5)
    X = jax.random.normal(kx, (B, F_in, T, N), jnp.float32)
    A_q = jax.nn.softmax(jax.random.normal(kq, (B, N, N), jnp.float32), axis=-1)
    A_h = jax.nn.softmax(jax.random.normal(kh, (B, N, N), jnp.float32), axis=-1)
    adpt = jax.nn.softmax(jax.random.normal(ka, (B, N, N), jnp.float32), axis=-1)
    params = init_params(kp, F_in, out_features, orders)

    out = d_gcn_forward(X, A_q, A_h, adpt, params, orders)
    out = jax.block_until_ready(out)
    assert out.shape == (B, out_features, T, N), out.shape

    ref = d_gcn_ref(X, A_q, A_h, adpt, params, orders)
    # bf16 MXU inputs -> not bit-identical to the f32 reference; observed error ~1e-3,
    # tolerance kept with ~10x margin.
    max_err = float(jnp.max(jnp.abs(out - ref)))
    assert jnp.allclose(out, ref, atol=2e-2, rtol=2e-2), max_err

    print("KERNEL_OK")
</pallas_src>

<mosaic_0001>
module attributes {stable_mosaic.version = 11 : i64} {
  func.func @_dgcn_fused_kernel(%arg0: i32, %arg1: memref<1x16x32xbf16, #tpu.memory_space<vmem>>, %arg2: memref<1x3x16x16xbf16, #tpu.memory_space<vmem>>, %arg3: memref<7x32x256xbf16, #tpu.memory_space<vmem>>, %arg4: memref<1x256xf32, #tpu.memory_space<vmem>>, %arg5: memref<1x16x256xf32, #tpu.memory_space<vmem>>) attributes {dimension_semantics = [#tpu.dimension_semantics<parallel>], iteration_bounds = array<i64: 2>, scalar_prefetch = 0 : i64, scratch_operands = 0 : i64, tpu.core_type = #tpu.core_type<tc>, window_params = [{transform_indices = @transform_0, window_bounds = array<i64: 1, 16, 32>}, {transform_indices = @transform_1, window_bounds = array<i64: 1, 3, 16, 16>}, {pipeline_mode = #tpu.pipeline_mode<synchronous>, transform_indices = @transform_2, window_bounds = array<i64: 7, 32, 256>}, {pipeline_mode = #tpu.pipeline_mode<synchronous>, transform_indices = @transform_3, window_bounds = array<i64: 1, 256>}, {transform_indices = @transform_4, window_bounds = array<i64: 1, 16, 256>}]} {
    %c0 = arith.constant 0 : index
    %c0_0 = arith.constant 0 : index
    %c0_1 = arith.constant 0 : index
    %0 = vector.load %arg1[%c0, %c0_0, %c0_1] : memref<1x16x32xbf16, #tpu.memory_space<vmem>>, vector<1x16x32xbf16>
    %1 = vector.shape_cast %0 : vector<1x16x32xbf16> to vector<16x32xbf16>
    %c0_2 = arith.constant 0 : index
    %c0_3 = arith.constant 0 : index
    %2 = vector.load %arg4[%c0_2, %c0_3] : memref<1x256xf32, #tpu.memory_space<vmem>>, vector<1x256xf32>
    %c0_4 = arith.constant 0 : index
    %c0_5 = arith.constant 0 : index
    %c0_6 = arith.constant 0 : index
    %3 = vector.load %arg3[%c0_4, %c0_5, %c0_6] : memref<7x32x256xbf16, #tpu.memory_space<vmem>>, vector<1x32x256xbf16>
    %4 = vector.shape_cast %3 : vector<1x32x256xbf16> to vector<32x256xbf16>
    %cst = arith.constant dense<0.000000e+00> : vector<16x256xf32>
    %5 = tpu.matmul %1, %4, %cst {dimension_numbers = #tpu.dot_dimension_numbers<[1], [0], [0], [1], [0, 0, 1, 1], [], []>} : vector<16x32xbf16>, vector<32x256xbf16>, vector<16x256xf32> -> vector<16x256xf32>
    %c0_7 = arith.constant 0 : index
    %c0_8 = arith.constant 0 : index
    %c0_9 = arith.constant 0 : index
    %c0_10 = arith.constant 0 : index
    %6 = vector.load %arg2[%c0_7, %c0_8, %c0_9, %c0_10] : memref<1x3x16x16xbf16, #tpu.memory_space<vmem>>, vector<1x1x16x16xbf16>
    %7 = vector.shape_cast %6 : vector<1x1x16x16xbf16> to vector<16x16xbf16>
    %c0_11 = arith.constant 0 : index
    %c1 = arith.constant 1 : index
    %c0_12 = arith.constant 0 : index
    %c0_13 = arith.constant 0 : index
    %8 = vector.load %arg2[%c0_11, %c1, %c0_12, %c0_13] : memref<1x3x16x16xbf16, #tpu.memory_space<vmem>>, vector<1x1x16x16xbf16>
    %9 = vector.shape_cast %8 : vector<1x1x16x16xbf16> to vector<16x16xbf16>
    %c0_14 = arith.constant 0 : index
    %c2 = arith.constant 2 : index
    %c0_15 = arith.constant 0 : index
    %c0_16 = arith.constant 0 : index
    %10 = vector.load %arg2[%c0_14, %c2, %c0_15, %c0_16] : memref<1x3x16x16xbf16, #tpu.memory_space<vmem>>, vector<1x1x16x16xbf16>
    %11 = vector.shape_cast %10 : vector<1x1x16x16xbf16> to vector<16x16xbf16>
    %cst_17 = arith.constant dense<0.000000e+00> : vector<16x32xf32>
    %12 = tpu.matmul %7, %1, %cst_17 {dimension_numbers = #tpu.dot_dimension_numbers<[1], [0], [0], [1], [0, 0, 1, 1], [], []>} : vector<16x16xbf16>, vector<16x32xbf16>, vector<16x32xf32> -> vector<16x32xf32>
    %13 = arith.truncf %12 : vector<16x32xf32> to vector<16x32xbf16>
    %c1_18 = arith.constant 1 : index
    %c0_19 = arith.constant 0 : index
    %c0_20 = arith.constant 0 : index
    %14 = vector.load %arg3[%c1_18, %c0_19, %c0_20] : memref<7x32x256xbf16, #tpu.memory_space<vmem>>, vector<1x32x256xbf16>
    %15 = vector.shape_cast %14 : vector<1x32x256xbf16> to vector<32x256xbf16>
    %cst_21 = arith.constant dense<0.000000e+00> : vector<16x256xf32>
    %16 = tpu.matmul %13, %15, %cst_21 {dimension_numbers = #tpu.dot_dimension_numbers<[1], [0], [0], [1], [0, 0, 1, 1], [], []>} : vector<16x32xbf16>, vector<32x256xbf16>, vector<16x256xf32> -> vector<16x256xf32>
    %17 = arith.addf %5, %16 : vector<16x256xf32>
    %cst_22 = arith.constant dense<0.000000e+00> : vector<16x32xf32>
    %18 = tpu.matmul %9, %1, %cst_22 {dimension_numbers = #tpu.dot_dimension_numbers<[1], [0], [0], [1], [0, 0, 1, 1], [], []>} : vector<16x16xbf16>, vector<16x32xbf16>, vector<16x32xf32> -> vector<16x32xf32>
    %19 = arith.truncf %18 : vector<16x32xf32> to vector<16x32xbf16>
    %c3 = arith.constant 3 : index
    %c0_23 = arith.constant 0 : index
    %c0_24 = arith.constant 0 : index
    %20 = vector.load %arg3[%c3, %c0_23, %c0_24] : memref<7x32x256xbf16, #tpu.memory_space<vmem>>, vector<1x32x256xbf16>
    %21 = vector.shape_cast %20 : vector<1x32x256xbf16> to vector<32x256xbf16>
    %cst_25 = arith.constant dense<0.000000e+00> : vector<16x256xf32>
    %22 = tpu.matmul %19, %21, %cst_25 {dimension_numbers = #tpu.dot_dimension_numbers<[1], [0], [0], [1], [0, 0, 1, 1], [], []>} : vector<16x32xbf16>, vector<32x256xbf16>, vector<16x256xf32> -> vector<16x256xf32>
    %23 = arith.addf %17, %22 : vector<16x256xf32>
    %cst_26 = arith.constant dense<0.000000e+00> : vector<16x32xf32>
    %24 = tpu.matmul %11, %1, %cst_26 {dimension_numbers = #tpu.dot_dimension_numbers<[1], [0], [0], [1], [0, 0, 1, 1], [], []>} : vector<16x16xbf16>, vector<16x32xbf16>, vector<16x32xf32> -> vector<16x32xf32>
    %25 = arith.truncf %24 : vector<16x32xf32> to vector<16x32xbf16>
    %c5 = arith.constant 5 : index
    %c0_27 = arith.constant 0 : index
    %c0_28 = arith.constant 0 : index
    %26 = vector.load %arg3[%c5, %c0_27, %c0_28] : memref<7x32x256xbf16, #tpu.memory_space<vmem>>, vector<1x32x256xbf16>
    %27 = vector.shape_cast %26 : vector<1x32x256xbf16> to vector<32x256xbf16>
    %cst_29 = arith.constant dense<0.000000e+00> : vector<16x256xf32>
    %28 = tpu.matmul %25, %27, %cst_29 {dimension_numbers = #tpu.dot_dimension_numbers<[1], [0], [0], [1], [0, 0, 1, 1], [], []>} : vector<16x32xbf16>, vector<32x256xbf16>, vector<16x256xf32> -> vector<16x256xf32>
    %29 = arith.addf %23, %28 : vector<16x256xf32>
    %cst_30 = arith.constant dense<0.000000e+00> : vector<16x32xf32>
    %30 = tpu.matmul %7, %13, %cst_30 {dimension_numbers = #tpu.dot_dimension_numbers<[1], [0], [0], [1], [0, 0, 1, 1], [], []>} : vector<16x16xbf16>, vector<16x32xbf16>, vector<16x32xf32> -> vector<16x32xf32>
    %31 = arith.truncf %30 : vector<16x32xf32> to vector<16x32xbf16>
    %c2_31 = arith.constant 2 : index
    %c0_32 = arith.constant 0 : index
    %c0_33 = arith.constant 0 : index
    %32 = vector.load %arg3[%c2_31, %c0_32, %c0_33] : memref<7x32x256xbf16, #tpu.memory_space<vmem>>, vector<1x32x256xbf16>
    %33 = vector.shape_cast %32 : vector<1x32x256xbf16> to vector<32x256xbf16>
    %cst_34 = arith.constant dense<0.000000e+00> : vector<16x256xf32>
    %34 = tpu.matmul %31, %33, %cst_34 {dimension_numbers = #tpu.dot_dimension_numbers<[1], [0], [0], [1], [0, 0, 1, 1], [], []>} : vector<16x32xbf16>, vector<32x256xbf16>, vector<16x256xf32> -> vector<16x256xf32>
    %35 = arith.addf %29, %34 : vector<16x256xf32>
    %cst_35 = arith.constant dense<0.000000e+00> : vector<16x32xf32>
    %36 = tpu.matmul %9, %19, %cst_35 {dimension_numbers = #tpu.dot_dimension_numbers<[1], [0], [0], [1], [0, 0, 1, 1], [], []>} : vector<16x16xbf16>, vector<16x32xbf16>, vector<16x32xf32> -> vector<16x32xf32>
    %37 = arith.truncf %36 : vector<16x32xf32> to vector<16x32xbf16>
    %c4 = arith.constant 4 : index
    %c0_36 = arith.constant 0 : index
    %c0_37 = arith.constant 0 : index
    %38 = vector.load %arg3[%c4, %c0_36, %c0_37] : memref<7x32x256xbf16, #tpu.memory_space<vmem>>, vector<1x32x256xbf16>
    %39 = vector.shape_cast %38 : vector<1x32x256xbf16> to vector<32x256xbf16>
    %cst_38 = arith.constant dense<0.000000e+00> : vector<16x256xf32>
    %40 = tpu.matmul %37, %39, %cst_38 {dimension_numbers = #tpu.dot_dimension_numbers<[1], [0], [0], [1], [0, 0, 1, 1], [], []>} : vector<16x32xbf16>, vector<32x256xbf16>, vector<16x256xf32> -> vector<16x256xf32>
    %41 = arith.addf %35, %40 : vector<16x256xf32>
    %cst_39 = arith.constant dense<0.000000e+00> : vector<16x32xf32>
    %42 = tpu.matmul %11, %25, %cst_39 {dimension_numbers = #tpu.dot_dimension_numbers<[1], [0], [0], [1], [0, 0, 1, 1], [], []>} : vector<16x16xbf16>, vector<16x32xbf16>, vector<16x32xf32> -> vector<16x32xf32>
    %43 = arith.truncf %42 : vector<16x32xf32> to vector<16x32xbf16>
    %c6 = arith.constant 6 : index
    %c0_40 = arith.constant 0 : index
    %c0_41 = arith.constant 0 : index
    %44 = vector.load %arg3[%c6, %c0_40, %c0_41] : memref<7x32x256xbf16, #tpu.memory_space<vmem>>, vector<1x32x256xbf16>
    %45 = vector.shape_cast %44 : vector<1x32x256xbf16> to vector<32x256xbf16>
    %cst_42 = arith.constant dense<0.000000e+00> : vector<16x256xf32>
    %46 = tpu.matmul %43, %45, %cst_42 {dimension_numbers = #tpu.dot_dimension_numbers<[1], [0], [0], [1], [0, 0, 1, 1], [], []>} : vector<16x32xbf16>, vector<32x256xbf16>, vector<16x256xf32> -> vector<16x256xf32>
    %47 = arith.addf %41, %46 : vector<16x256xf32>
    %48 = vector.broadcast %2 : vector<1x256xf32> to vector<16x256xf32>
    %49 = arith.addf %47, %48 : vector<16x256xf32>
    %cst_43 = arith.constant 0.000000e+00 : f32
    %50 = vector.broadcast %cst_43 : f32 to vector<16x256xf32>
    %51 = arith.maximumf %49, %50 : vector<16x256xf32>
    %c0_44 = arith.constant 0 : index
    %c0_45 = arith.constant 0 : index
    %c0_46 = arith.constant 0 : index
    %52 = vector.load %arg5[%c0_44, %c0_45, %c0_46] : memref<1x16x256xf32, #tpu.memory_space<vmem>>, vector<1x16x256xf32>
    %53 = vector.shape_cast %52 : vector<1x16x256xf32> to vector<16x256xf32>
    %54 = vector.shape_cast %51 : vector<16x256xf32> to vector<1x16x256xf32>
    tpu.vector_store %arg5[%c0_44, %c0_45, %c0_46], %54 {strides = array<i32>} : memref<1x16x256xf32, #tpu.memory_space<vmem>>, vector<1x16x256xf32>,
    return
  }
  func.func @transform_0(%arg0: i32) -> (i32, i32, i32) {
    %c0_i32 = arith.constant 0 : i32
    %c0_i32_0 = arith.constant 0 : i32
    %c0_i32_1 = arith.constant 0 : i32
    return %arg0, %c0_i32, %c0_i32_0 : i32, i32, i32
  }
  func.func @transform_1(%arg0: i32) -> (i32, i32, i32, i32) {
    %c0_i32 = arith.constant 0 : i32
    %c0_i32_0 = arith.constant 0 : i32
    %c0_i32_1 = arith.constant 0 : i32
    %c0_i32_2 = arith.constant 0 : i32
    return %arg0, %c0_i32, %c0_i32_0, %c0_i32_1 : i32, i32, i32, i32
  }
  func.func @transform_2(%arg0: i32) -> (i32, i32, i32) {
    %c0_i32 = arith.constant 0 : i32
    %c0_i32_0 = arith.constant 0 : i32
    %c0_i32_1 = arith.constant 0 : i32
    %c0_i32_2 = arith.constant 0 : i32
    return %c0_i32, %c0_i32_0, %c0_i32_1 : i32, i32, i32
  }
  func.func @transform_3(%arg0: i32) -> (i32, i32) {
    %c0_i32 = arith.constant 0 : i32
    %c0_i32_0 = arith.constant 0 : i32
    %c0_i32_1 = arith.constant 0 : i32
    return %c0_i32, %c0_i32_0 : i32, i32
  }
  func.func @transform_4(%arg0: i32) -> (i32, i32, i32) {
    %c0_i32 = arith.constant 0 : i32
    %c0_i32_0 = arith.constant 0 : i32
    %c0_i32_1 = arith.constant 0 : i32
    return %arg0, %c0_i32, %c0_i32_0 : i32, i32, i32
  }
}

</mosaic_0001>

<llo_original>
// kernel: _d_gcn_forward_impl.1
$region0: #{_d_gcn_forward_impl.1}
  #allocation0 [shape = 'u32[]', space=smem, size = 0x4, offset = 0x4, fixed_abs, tag = 'smem constant byte address 0x4 - core index']
  #allocation1 [shape = 'u32[144,128]{1,0:T(1,128)}', space=vmem, size = 0x12000, scoped, tag = 'internal scratch']
  %s0 = inlined_call_operand.vmem [shape: bf16[2,16,32], index: 0, kind: input, shape index: {}]
  %s1 = inlined_call_operand.vmem [shape: bf16[2,3,16,16], index: 1, kind: input, shape index: {}]
  %s2 = inlined_call_operand.vmem [shape: bf16[7,32,256], index: 2, kind: input, shape index: {}]
  %s3 = inlined_call_operand.vmem [shape: f32[1,256], index: 3, kind: input, shape index: {}]
  %s4 = inlined_call_operand.vmem [shape: f32[2,16,256], index: 4, kind: output, shape index: {}]
  %s5 = sld [smem:[#allocation0]]
  $region49: #{_d_gcn_forward_impl.1} parent=0
    _
  %s7 = ssub.s32 1, %s5
  %s8 = scalar_select 0, %s7, %s5
  loop: start=0, step=1, limit=4
  $region2: #{_d_gcn_forward_impl.1} parent=0 // loop_pre_header
    _
  $region3: #{_d_gcn_forward_impl.1} parent=0 // loop_header
    %s10 = sphi 0, %s14
    %p11 = scmp.ge.s32.totalorder %s10, 4
    %s20 = sphi 0, %s22
    %s23 = sphi 0, %s20
    %s24 = sphi 0, %s23
    %s40 = sphi 0, %s24
    %s46 = sphi 0, %s48
    %s49 = sphi 0, %s46
    %s50 = sphi 0, %s49
    %s66 = sphi 0, %s50
    %s70 = sphi 0, %s70
    %s72 = sphi 0, %s70
    %s73 = sphi 0, %s72
    %s87 = sphi 0, %s73
    %s91 = sphi 0, %s91
    %s93 = sphi 0, %s91
    %s94 = sphi 0, %s93
    %s108 = sphi 0, %s94
    %s114 = sphi 0, %s116
    %s117 = sphi 0, %s114
    %s118 = sphi 0, %s117
    %s134 = sphi 0, %s118
  $region4: #{_d_gcn_forward_impl.1} parent=0 // loop_header_branch
    %13 = sbr.rel (%p11) target = $region8
  $region5: #{_d_gcn_forward_impl.1} parent=0 // loop_body
    %s15 = ssub.s32 %s10, 1
    %s16 = ssub.s32 %s10, 2
    %s17 = sadd.s32 %s10, 1
    %s18 = ssub.s32 %s10, %s17
    %p19 = scmp.eq.s32.totalorder %s18, 0
    %s21 = sadd.s32 %s20, 1
    %s22 = scalar_select %p19, %s20, %s21
    %p25 = pneg %p19
    %p26 = scmp.eq.s32.totalorder %s10, 1
    %p27 = por %p25, %p26
    %p28 = scmp.ne.s32.totalorder %s20, %s23
    %p29 = scmp.eq.s32.totalorder %s10, 0
    %p30 = por %p28, %p29
    %p31 = scmp.ne.s32.totalorder %s20, %s23
    %p32 = scmp.eq.s32.totalorder %s15, 1
    %p33 = por %p31, %p32
    %p34 = scmp.ne.s32.totalorder %s23, %s24
    %p35 = scmp.eq.s32.totalorder %s15, 0
    %p36 = por %p34, %p35
    %p37 = scmp.ne.s32.totalorder %s23, %s24
    %p38 = scmp.eq.s32.totalorder %s16, 1
    %p39 = por %p37, %p38
    %p41 = scmp.ne.s32.totalorder %s24, %s40
    %p42 = scmp.eq.s32.totalorder %s16, 0
    %p43 = por %p41, %p42
    %s44 = ssub.s32 %s10, %s17
    %p45 = scmp.eq.s32.totalorder %s44, 0
    %s47 = sadd.s32 %s46, 1
    %s48 = scalar_select %p45, %s46, %s47
    %p51 = pneg %p45
    %p52 = scmp.eq.s32.totalorder %s10, 1
    %p53 = por %p51, %p52
    %p54 = scmp.ne.s32.totalorder %s46, %s49
    %p55 = scmp.eq.s32.totalorder %s10, 0
    %p56 = por %p54, %p55
    %p57 = scmp.ne.s32.totalorder %s46, %s49
    %p58 = scmp.eq.s32.totalorder %s15, 1
    %p59 = por %p57, %p58
    %p60 = scmp.ne.s32.totalorder %s49, %s50
    %p61 = scmp.eq.s32.totalorder %s15, 0
    %p62 = por %p60, %p61
    %p63 = scmp.ne.s32.totalorder %s49, %s50
    %p64 = scmp.eq.s32.totalorder %s16, 1
    %p65 = por %p63, %p64
    %p67 = scmp.ne.s32.totalorder %s50, %s66
    %p68 = scmp.eq.s32.totalorder %s16, 0
    %p69 = por %p67, %p68
    %s71 = sadd.s32 %s70, 1
    %p74 = scmp.eq.s32.totalorder %s10, 1
    %p75 = scmp.ne.s32.totalorder %s70, %s72
    %p76 = scmp.eq.s32.totalorder %s10, 0
    %p77 = por %p75, %p76
    %p78 = scmp.ne.s32.totalorder %s70, %s72
    %p79 = scmp.eq.s32.totalorder %s15, 1
    %p80 = por %p78, %p79
    %p81 = scmp.ne.s32.totalorder %s72, %s73
    %p82 = scmp.eq.s32.totalorder %s15, 0
    %p83 = por %p81, %p82
    %p84 = scmp.ne.s32.totalorder %s72, %s73
    %p85 = scmp.eq.s32.totalorder %s16, 1
    %p86 = por %p84, %p85
    %p88 = scmp.ne.s32.totalorder %s73, %s87
    %p89 = scmp.eq.s32.totalorder %s16, 0
    %p90 = por %p88, %p89
    %s92 = sadd.s32 %s91, 1
    %p95 = scmp.eq.s32.totalorder %s10, 1
    %p96 = scmp.ne.s32.totalorder %s91, %s93
    %p97 = scmp.eq.s32.totalorder %s10, 0
    %p98 = por %p96, %p97
    %p99 = scmp.ne.s32.totalorder %s91, %s93
    %p100 = scmp.eq.s32.totalorder %s15, 1
    %p101 = por %p99, %p100
    %p102 = scmp.ne.s32.totalorder %s93, %s94
    %p103 = scmp.eq.s32.totalorder %s15, 0
    %p104 = por %p102, %p103
    %p105 = scmp.ne.s32.totalorder %s93, %s94
    %p106 = scmp.eq.s32.totalorder %s16, 1
    %p107 = por %p105, %p106
    %p109 = scmp.ne.s32.totalorder %s94, %s108
    %p110 = scmp.eq.s32.totalorder %s16, 0
    %p111 = por %p109, %p110
    %s112 = ssub.s32 %s10, %s17
    %p113 = scmp.eq.s32.totalorder %s112, 0
    %s115 = sadd.s32 %s114, 1
    %s116 = scalar_select %p113, %s114, %s115
    %p119 = pneg %p113
    %p120 = scmp.eq.s32.totalorder %s10, 1
    %p121 = por %p119, %p120
    %p122 = scmp.ne.s32.totalorder %s114, %s117
    %p123 = scmp.eq.s32.totalorder %s10, 0
    %p124 = por %p122, %p123
    %p125 = scmp.ne.s32.totalorder %s114, %s117
    %p126 = scmp.eq.s32.totalorder %s15, 1
    %p127 = por %p125, %p126
    %p128 = scmp.ne.s32.totalorder %s117, %s118
    %p129 = scmp.eq.s32.totalorder %s15, 0
    %p130 = por %p128, %p129
    %p131 = scmp.ne.s32.totalorder %s117, %s118
    %p132 = scmp.eq.s32.totalorder %s16, 1
    %p133 = por %p131, %p132
    %p135 = scmp.ne.s32.totalorder %s118, %s134
    %p136 = scmp.eq.s32.totalorder %s16, 0
    %p137 = por %p135, %p136
    %p138 = scmp.le.s32.totalorder 1, %s10
    %p139 = scmp.lt.s32.totalorder %s10, 3
    %p140 = pnand %p138, %p139
    %p141 = pneg %p140
    // Predicated region
    $region9: #{_d_gcn_forward_impl.1} parent=5 // pred_check
      _
    $region10: #{_d_gcn_forward_impl.1} parent=5 // pred_check_branch
      %143 = sbr.rel (%p140) target = $region12
    $region11: #{_d_gcn_forward_impl.1} parent=5 // pred_region
      %s144 = ssub.s32 %s10, 1
      // Predicated region
      $region13: #{_d_gcn_forward_impl.1} parent=11 // pred_check
        %p145 = pneg %p83
      $region14: #{_d_gcn_forward_impl.1} parent=11 // pred_check_branch
        %147 = sbr.rel (%p145) target = $region16
      $region15: #{_d_gcn_forward_impl.1} parent=11 // pred_region
        _
      $region16: #{_d_gcn_forward_impl.1} parent=11 // pred_fallthru
        _
      // Predicated region
      $region17: #{_d_gcn_forward_impl.1} parent=11 // pred_check
        %p148 = pneg %p104
      $region18: #{_d_gcn_forward_impl.1} parent=11 // pred_check_branch
        %150 = sbr.rel (%p148) target = $region20
      $region19: #{_d_gcn_forward_impl.1} parent=11 // pred_region
        _
      $region20: #{_d_gcn_forward_impl.1} parent=11 // pred_fallthru
        _
    $region12: #{_d_gcn_forward_impl.1} parent=5 // pred_fallthru
      _
    %p151 = scmp.lt.s32.totalorder %s10, 2
    // Predicated region
    $region21: #{_d_gcn_forward_impl.1} parent=5 // pred_check
      %p152 = pneg %p151
    $region22: #{_d_gcn_forward_impl.1} parent=5 // pred_check_branch
      %154 = sbr.rel (%p152) target = $region24
    $region23: #{_d_gcn_forward_impl.1} parent=5 // pred_region
      // Predicated region
      $region25: #{_d_gcn_forward_impl.1} parent=23 // pred_check
        %p155 = pneg %p30
      $region26: #{_d_gcn_forward_impl.1} parent=23 // pred_check_branch
        %157 = sbr.rel (%p155) target = $region28
      $region27: #{_d_gcn_forward_impl.1} parent=23 // pred_region
        %p158 = scmp.lt.s32.totalorder %s10, 1
        %s159 = scalar_select %p158, %s10, 1
        %s160 = smul.addr %s159, 2
        %s161 = smul.addr %s160, 4
        %s162 = scalar_lea.vmem %s0, %s161
      $region28: #{_d_gcn_forward_impl.1} parent=23 // pred_fallthru
        _
      // Predicated region
      $region29: #{_d_gcn_forward_impl.1} parent=23 // pred_check
        %p163 = pneg %p56
      $region30: #{_d_gcn_forward_impl.1} parent=23 // pred_check_branch
        %165 = sbr.rel (%p163) target = $region32
      $region31: #{_d_gcn_forward_impl.1} parent=23 // pred_region
        %p166 = scmp.lt.s32.totalorder %s10, 1
        %s167 = scalar_select %p166, %s10, 1
        %s168 = smul.addr %s167, 6
        %s169 = smul.addr %s168, 4
        %s170 = scalar_lea.vmem %s1, %s169
      $region32: #{_d_gcn_forward_impl.1} parent=23 // pred_fallthru
        _
    $region24: #{_d_gcn_forward_impl.1} parent=5 // pred_fallthru
      _
    %p171 = scmp.le.s32.totalorder 1, %s10
    %p172 = scmp.lt.s32.totalorder %s10, 3
    %p173 = pnand %p171, %p172
    %p174 = pneg %p173
    // Predicated region
    $region33: #{_d_gcn_forward_impl.1} parent=5 // pred_check
      _
    $region34: #{_d_gcn_forward_impl.1} parent=5 // pred_check_branch
      %176 = sbr.rel (%p173) target = $region36
    $region35: #{_d_gcn_forward_impl.1} parent=5 // pred_region
      %s177 = ssub.s32 %s10, 1
      %p178 = scmp.lt.s32.totalorder %s15, 1
      %s179 = scalar_select %p178, %s15, 1
      %s180 = smul.addr %s179, 2
      %s181 = smul.addr %s180, 4
      %s182 = scalar_lea.vmem %s0, %s181
      %p183 = pneg %p36
      %p184 = pneg %p33
      %p185 = scmp.lt.s32.totalorder %s15, 1
      %s186 = scalar_select %p185, %s15, 1
      %s187 = smul.addr %s186, 6
      %s188 = smul.addr %s187, 4
      %s189 = scalar_lea.vmem %s1, %s188
      %p190 = pneg %p62
      %p191 = pneg %p59
      %p192 = pneg %p83
      %p193 = pneg %p80
      %p194 = pneg %p104
      %p195 = pneg %p101
      %p196 = pneg %p130
      %p197 = pneg %p127
      %p198 = scmp.lt.s32.totalorder %s15, 1
      %s199 = scalar_select %p198, %s15, 1
      %s200 = smul.addr %s199, 4
      %s201 = smul.addr %s200, 8
      %s202 = scalar_lea.vmem %s4, %s201
      %p203 = scmp.lt.s32.totalorder %s15, 1
      %s204 = scalar_select %p203, %s15, 1
      %s205 = smul.addr %s204, 2
      %s206 = smul.addr %s205, 4
      %s207 = scalar_lea.vmem %s0, %s206
      %p208 = scmp.lt.s32.totalorder %s15, 1
      %s209 = scalar_select %p208, %s15, 1
      %s210 = smul.addr %s209, 6
      %s211 = smul.addr %s210, 4
      %s212 = scalar_lea.vmem %s1, %s211
      %p213 = scmp.lt.s32.totalorder %s15, 1
      %s214 = scalar_select %p213, %s15, 1
      %s215 = smul.addr %s214, 4
      %s216 = smul.addr %s215, 8
      %s217 = scalar_lea.vmem %s4, %s216
      %v219 = vld [vmem:[%s207] sm:$0xf]
      %v220 = vld [vmem:[%s207 + $0x4] sm:$0xf]
      %v221 = vld [vmem:[%s3] sm:$0x3]
      %v222 = vld [vmem:[%s2] sm:$0xff]
      %v223 = vld [vmem:[%s2 + $0x8] sm:$0xff]
      %v224 = vld [vmem:[%s2 + $0x10] sm:$0xff]
      %v225 = vld [vmem:[%s2 + $0x18] sm:$0xff]
      %v226 = vld [vmem:[%s212] sm:$0xf]
      %v227 = vld [vmem:[%s212 + $0x4] sm:$0xf]
      %s228 = scalar_lea.vmem %s212, 8
      %v229 = vld [vmem:[%s228] sm:$0xf]
      %v230 = vld [vmem:[%s228 + $0x4] sm:$0xf]
      %s231 = scalar_lea.vmem %s212, 16
      %v232 = vld [vmem:[%s231] sm:$0xf]
      %v233 = vld [vmem:[%s231 + $0x4] sm:$0xf]
      %v236 = vunpack.c.l.b16 %v226
      %v237 = vunpack.c.l.b16 %v227
      %v238 = vpack.c.b16 %v237, %v236
      %v241 = vunpack.c.l.b16 %v219
      %v242 = vunpack.c.l.b16 %v220
      %v243 = vpack.c.b16 %v242, %v241
      %vm245 = vcmask 130048
      %v247 = vsel %vm245, %v238, 0
      %249 = vmatprep.subr.bf16.mxu0 0
      %250 = vmatpush1.bf16.msra.mxu0 %v243
      %251 = vmatprep.subr.bf16.mxu0 0
      %252 = vmatpush1.bf16.msra.mxu0 0
      %253 = vmatprep.subr.bf16.mxu0 0
      %254 = vmatpush1.bf16.msra.mxu0 0
      %255 = vmatprep.subr.bf16.mxu0 0
      %256 = vmatpush1.bf16.msra.mxu0 0
      %257 = vmatprep.subr.bf16.mxu0 0
      %258 = vmatpush1.bf16.msra.mxu0 0
      %259 = vmatprep.subr.bf16.mxu0 0
      %260 = vmatpush1.bf16.msra.mxu0 0
      %261 = vmatprep.subr.bf16.mxu0 0
      %262 = vmatpush1.bf16.msra.mxu0 0
      %263 = vmatprep.subr.bf16.mxu0 0
      %264 = vmatpush1.bf16.msra.mxu0 0
      %265 = vmatprep.subr.bf16.mxu0 0
      %266 = vmatpush1.bf16.msra.mxu0 0
      %267 = vmatprep.subr.bf16.mxu0 0
      %268 = vmatpush1.bf16.msra.mxu0 0
      %269 = vmatprep.subr.bf16.mxu0 0
      %270 = vmatpush1.bf16.msra.mxu0 0
      %271 = vmatprep.subr.bf16.mxu0 0
      %272 = vmatpush1.bf16.msra.mxu0 0
      %273 = vmatprep.subr.bf16.mxu0 0
      %274 = vmatpush1.bf16.msra.mxu0 0
      %275 = vmatprep.subr.bf16.mxu0 0
      %276 = vmatpush1.bf16.msra.mxu0 0
      %277 = vmatprep.subr.bf16.mxu0 0
      %278 = vmatpush1.bf16.msra.mxu0 0
      %279 = vmatprep.subr.bf16.mxu0 0
      %280 = vmatpush1.bf16.msra.mxu0 0
      %281 = vmatprep.mubr.bf16.mxu0 0
      %282 = vmatmul.mubr.bf16.gmra.mrb[0].mxu0 %v247
      %v283 = vpop.f32.mrb[0].mxu0
      %v284 = vadd.f32 0.0, %v283
      %v285 = vpop.f32.mrb[0].mxu0
      %v286 = vpop.f32.mrb[0].mxu0
      %v287 = vadd.f32 0.0, %v286
      %v288 = vpop.f32.mrb[0].mxu0
      %289 = vdwg.mxu0
      %v290 = vpack.c.bf16 %v287, %v284
      %s291 = scalar_lea.vmem %s2, 32
      %v292 = vld [vmem:[%s291] sm:$0xff]
      %v293 = vld [vmem:[%s291 + $0x8] sm:$0xff]
      %v294 = vld [vmem:[%s291 + $0x10] sm:$0xff]
      %v295 = vld [vmem:[%s291 + $0x18] sm:$0xff]
      %v300 = vunpack.c.l.b16 %v292
      %v301 = vunpack.c.h.b16 %v292
      %v302 = vunpack.c.l.b16 %v293
      %v303 = vunpack.c.h.b16 %v293
      %v304 = vunpack.c.l.b16 %v294
      %v305 = vunpack.c.h.b16 %v294
      %v306 = vunpack.c.l.b16 %v295
      %v307 = vunpack.c.h.b16 %v295
      %v308 = vpack.c.b16 %v302, %v300
      %v309 = vpack.c.b16 %v303, %v301
      %v310 = vpack.c.b16 %v306, %v304
      %v311 = vpack.c.b16 %v307, %v305
      %vm316 = vcmask 261120
      %v318 = vsel %vm316, %v290, 0
      %320 = vmatprep.subr.bf16.mxu0 %v309
      %321 = vmatpush1.bf16.msra.mxu0 %v308
      %322 = vmatprep.subr.bf16.mxu0 %v311
      %323 = vmatpush1.bf16.msra.mxu0 %v310
      %324 = vmatprep.subr.bf16.mxu0 0
      %325 = vmatpush1.bf16.msra.mxu0 0
      %326 = vmatprep.subr.bf16.mxu0 0
      %327 = vmatpush1.bf16.msra.mxu0 0
      %328 = vmatprep.subr.bf16.mxu0 0
      %329 = vmatpush1.bf16.msra.mxu0 0
      %330 = vmatprep.subr.bf16.mxu0 0
      %331 = vmatpush1.bf16.msra.mxu0 0
      %332 = vmatprep.subr.bf16.mxu0 0
      %333 = vmatpush1.bf16.msra.mxu0 0
      %334 = vmatprep.subr.bf16.mxu0 0
      %335 = vmatpush1.bf16.msra.mxu0 0
      %336 = vmatprep.subr.bf16.mxu0 0
      %337 = vmatpush1.bf16.msra.mxu0 0
      %338 = vmatprep.subr.bf16.mxu0 0
      %339 = vmatpush1.bf16.msra.mxu0 0
      %340 = vmatprep.subr.bf16.mxu0 0
      %341 = vmatpush1.bf16.msra.mxu0 0
      %342 = vmatprep.subr.bf16.mxu0 0
      %343 = vmatpush1.bf16.msra.mxu0 0
      %344 = vmatprep.subr.bf16.mxu0 0
      %345 = vmatpush1.bf16.msra.mxu0 0
      %346 = vmatprep.subr.bf16.mxu0 0
      %347 = vmatpush1.bf16.msra.mxu0 0
      %348 = vmatprep.subr.bf16.mxu0 0
      %349 = vmatpush1.bf16.msra.mxu0 0
      %350 = vmatprep.subr.bf16.mxu0 0
      %351 = vmatpush1.bf16.msra.mxu0 0
      %352 = vmatprep.mubr.bf16.mxu0 0
      %353 = vmatmul.mubr.bf16.gmra.mrb[0].mxu0 %v318
      %v354 = vpop.f32.mrb[0].mxu0
      %v355 = vadd.f32 0.0, %v354
      %v356 = vpop.f32.mrb[0].mxu0
      %v357 = vadd.f32 0.0, %v356
      %v358 = vpop.f32.mrb[0].mxu0
      %v359 = vadd.f32 0.0, %v358
      %v360 = vpop.f32.mrb[0].mxu0
      %v361 = vadd.f32 0.0, %v360
      %362 = vdwg.mxu0
      %v367 = vunpack.c.l.b16 %v222
      %v368 = vunpack.c.h.b16 %v222
      %v369 = vunpack.c.l.b16 %v223
      %v370 = vunpack.c.h.b16 %v223
      %v371 = vunpack.c.l.b16 %v224
      %v372 = vunpack.c.h.b16 %v224
      %v373 = vunpack.c.l.b16 %v225
      %v374 = vunpack.c.h.b16 %v225
      %v375 = vpack.c.b16 %v369, %v367
      %v376 = vpack.c.b16 %v370, %v368
      %v377 = vpack.c.b16 %v373, %v371
      %v378 = vpack.c.b16 %v374, %v372
      %v384 = vsel %vm316, %v243, 0
      %386 = vmatprep.subr.bf16.mxu0 %v376
      %387 = vmatpush1.bf16.msra.mxu0 %v375
      %388 = vmatprep.subr.bf16.mxu0 %v378
      %389 = vmatpush1.bf16.msra.mxu0 %v377
      %390 = vmatprep.subr.bf16.mxu0 0
      %391 = vmatpush1.bf16.msra.mxu0 0
      %392 = vmatprep.subr.bf16.mxu0 0
      %393 = vmatpush1.bf16.msra.mxu0 0
      %394 = vmatprep.subr.bf16.mxu0 0
      %395 = vmatpush1.bf16.msra.mxu0 0
      %396 = vmatprep.subr.bf16.mxu0 0
      %397 = vmatpush1.bf16.msra.mxu0 0
      %398 = vmatprep.subr.bf16.mxu0 0
      %399 = vmatpush1.bf16.msra.mxu0 0
      %400 = vmatprep.subr.bf16.mxu0 0
      %401 = vmatpush1.bf16.msra.mxu0 0
      %402 = vmatprep.subr.bf16.mxu0 0
      %403 = vmatpush1.bf16.msra.mxu0 0
      %404 = vmatprep.subr.bf16.mxu0 0
      %405 = vmatpush1.bf16.msra.mxu0 0
      %406 = vmatprep.subr.bf16.mxu0 0
      %407 = vmatpush1.bf16.msra.mxu0 0
      %408 = vmatprep.subr.bf16.mxu0 0
      %409 = vmatpush1.bf16.msra.mxu0 0
      %410 = vmatprep.subr.bf16.mxu0 0
      %411 = vmatpush1.bf16.msra.mxu0 0
      %412 = vmatprep.subr.bf16.mxu0 0
      %413 = vmatpush1.bf16.msra.mxu0 0
      %414 = vmatprep.subr.bf16.mxu0 0
      %415 = vmatpush1.bf16.msra.mxu0 0
      %416 = vmatprep.subr.bf16.mxu0 0
      %417 = vmatpush1.bf16.msra.mxu0 0
      %418 = vmatprep.mubr.bf16.mxu0 0
      %419 = vmatmul.mubr.bf16.gmra.mrb[0].mxu0 %v384
      %v420 = vpop.f32.mrb[0].mxu0
      %v421 = vadd.f32 %v355, %v420
      %v422 = vpop.f32.mrb[0].mxu0
      %v423 = vadd.f32 %v357, %v422
      %v424 = vpop.f32.mrb[0].mxu0
      %v425 = vadd.f32 %v359, %v424
      %v426 = vpop.f32.mrb[0].mxu0
      %v427 = vadd.f32 %v361, %v426
      %428 = vdwg.mxu0
      %v431 = vunpack.c.l.b16 %v229
      %v432 = vunpack.c.l.b16 %v230
      %v433 = vpack.c.b16 %v432, %v431
      %v435 = vsel %vm245, %v433, 0
      %437 = vmatprep.subr.bf16.mxu0 0
      %438 = vmatpush1.bf16.msra.mxu0 %v243
      %439 = vmatprep.subr.bf16.mxu0 0
      %440 = vmatpush1.bf16.msra.mxu0 0
      %441 = vmatprep.subr.bf16.mxu0 0
      %442 = vmatpush1.bf16.msra.mxu0 0
      %443 = vmatprep.subr.bf16.mxu0 0
      %444 = vmatpush1.bf16.msra.mxu0 0
      %445 = vmatprep.subr.bf16.mxu0 0
      %446 = vmatpush1.bf16.msra.mxu0 0
      %447 = vmatprep.subr.bf16.mxu0 0
      %448 = vmatpush1.bf16.msra.mxu0 0
      %449 = vmatprep.subr.bf16.mxu0 0
      %450 = vmatpush1.bf16.msra.mxu0 0
      %451 = vmatprep.subr.bf16.mxu0 0
      %452 = vmatpush1.bf16.msra.mxu0 0
      %453 = vmatprep.subr.bf16.mxu0 0
      %454 = vmatpush1.bf16.msra.mxu0 0
      %455 = vmatprep.subr.bf16.mxu0 0
      %456 = vmatpush1.bf16.msra.mxu0 0
      %457 = vmatprep.subr.bf16.mxu0 0
      %458 = vmatpush1.bf16.msra.mxu0 0
      %459 = vmatprep.subr.bf16.mxu0 0
      %460 = vmatpush1.bf16.msra.mxu0 0
      %461 = vmatprep.subr.bf16.mxu0 0
      %462 = vmatpush1.bf16.msra.mxu0 0
      %463 = vmatprep.subr.bf16.mxu0 0
      %464 = vmatpush1.bf16.msra.mxu0 0
      %465 = vmatprep.subr.bf16.mxu0 0
      %466 = vmatpush1.bf16.msra.mxu0 0
      %467 = vmatprep.subr.bf16.mxu0 0
      %468 = vmatpush1.bf16.msra.mxu0 0
      %469 = vmatprep.mubr.bf16.mxu0 0
      %470 = vmatmul.mubr.bf16.gmra.mrb[0].mxu0 %v435
      %v471 = vpop.f32.mrb[0].mxu0
      %v472 = vadd.f32 0.0, %v471
      %v473 = vpop.f32.mrb[0].mxu0
      %v474 = vpop.f32.mrb[0].mxu0
      %v475 = vadd.f32 0.0, %v474
      %v476 = vpop.f32.mrb[0].mxu0
      %477 = vdwg.mxu0
      %v478 = vpack.c.bf16 %v475, %v472
      %s479 = scalar_lea.vmem %s2, 96
      %v480 = vld [vmem:[%s479] sm:$0xff]
      %v481 = vld [vmem:[%s479 + $0x8] sm:$0xff]
      %v482 = vld [vmem:[%s479 + $0x10] sm:$0xff]
      %v483 = vld [vmem:[%s479 + $0x18] sm:$0xff]
      %v488 = vunpack.c.l.b16 %v480
      %v489 = vunpack.c.h.b16 %v480
      %v490 = vunpack.c.l.b16 %v481
      %v491 = vunpack.c.h.b16 %v481
      %v492 = vunpack.c.l.b16 %v482
      %v493 = vunpack.c.h.b16 %v482
      %v494 = vunpack.c.l.b16 %v483
      %v495 = vunpack.c.h.b16 %v483
      %v496 = vpack.c.b16 %v490, %v488
      %v497 = vpack.c.b16 %v491, %v489
      %v498 = vpack.c.b16 %v494, %v492
      %v499 = vpack.c.b16 %v495, %v493
      %v505 = vsel %vm316, %v478, 0
      %507 = vmatprep.subr.bf16.mxu0 %v497
      %508 = vmatpush1.bf16.msra.mxu0 %v496
      %509 = vmatprep.subr.bf16.mxu0 %v499
      %510 = vmatpush1.bf16.msra.mxu0 %v498
      %511 = vmatprep.subr.bf16.mxu0 0
      %512 = vmatpush1.bf16.msra.mxu0 0
      %513 = vmatprep.subr.bf16.mxu0 0
      %514 = vmatpush1.bf16.msra.mxu0 0
      %515 = vmatprep.subr.bf16.mxu0 0
      %516 = vmatpush1.bf16.msra.mxu0 0
      %517 = vmatprep.subr.bf16.mxu0 0
      %518 = vmatpush1.bf16.msra.mxu0 0
      %519 = vmatprep.subr.bf16.mxu0 0
      %520 = vmatpush1.bf16.msra.mxu0 0
      %521 = vmatprep.subr.bf16.mxu0 0
      %522 = vmatpush1.bf16.msra.mxu0 0
      %523 = vmatprep.subr.bf16.mxu0 0
      %524 = vmatpush1.bf16.msra.mxu0 0
      %525 = vmatprep.subr.bf16.mxu0 0
      %526 = vmatpush1.bf16.msra.mxu0 0
      %527 = vmatprep.subr.bf16.mxu0 0
      %528 = vmatpush1.bf16.msra.mxu0 0
      %529 = vmatprep.subr.bf16.mxu0 0
      %530 = vmatpush1.bf16.msra.mxu0 0
      %531 = vmatprep.subr.bf16.mxu0 0
      %532 = vmatpush1.bf16.msra.mxu0 0
      %533 = vmatprep.subr.bf16.mxu0 0
      %534 = vmatpush1.bf16.msra.mxu0 0
      %535 = vmatprep.subr.bf16.mxu0 0
      %536 = vmatpush1.bf16.msra.mxu0 0
      %537 = vmatprep.subr.bf16.mxu0 0
      %538 = vmatpush1.bf16.msra.mxu0 0
      %539 = vmatprep.mubr.bf16.mxu0 0
      %540 = vmatmul.mubr.bf16.gmra.mrb[0].mxu0 %v505
      %v541 = vpop.f32.mrb[0].mxu0
      %v542 = vadd.f32 0.0, %v541
      %v543 = vpop.f32.mrb[0].mxu0
      %v544 = vadd.f32 0.0, %v543
      %v545 = vpop.f32.mrb[0].mxu0
      %v546 = vadd.f32 0.0, %v545
      %v547 = vpop.f32.mrb[0].mxu0
      %v548 = vadd.f32 0.0, %v547
      %549 = vdwg.mxu0
      %v550 = vadd.f32 %v421, %v542
      %v551 = vadd.f32 %v423, %v544
      %v552 = vadd.f32 %v425, %v546
      %v553 = vadd.f32 %v427, %v548
      %v556 = vunpack.c.l.b16 %v232
      %v557 = vunpack.c.l.b16 %v233
      %v558 = vpack.c.b16 %v557, %v556
      %v560 = vsel %vm245, %v558, 0
      %562 = vmatprep.subr.bf16.mxu0 0
      %563 = vmatpush1.bf16.msra.mxu0 %v243
      %564 = vmatprep.subr.bf16.mxu0 0
      %565 = vmatpush1.bf16.msra.mxu0 0
      %566 = vmatprep.subr.bf16.mxu0 0
      %567 = vmatpush1.bf16.msra.mxu0 0
      %568 = vmatprep.subr.bf16.mxu0 0
      %569 = vmatpush1.bf16.msra.mxu0 0
      %570 = vmatprep.subr.bf16.mxu0 0
      %571 = vmatpush1.bf16.msra.mxu0 0
      %572 = vmatprep.subr.bf16.mxu0 0
      %573 = vmatpush1.bf16.msra.mxu0 0
      %574 = vmatprep.subr.bf16.mxu0 0
      %575 = vmatpush1.bf16.msra.mxu0 0
      %576 = vmatprep.subr.bf16.mxu0 0
      %577 = vmatpush1.bf16.msra.mxu0 0
      %578 = vmatprep.subr.bf16.mxu0 0
      %579 = vmatpush1.bf16.msra.mxu0 0
      %580 = vmatprep.subr.bf16.mxu0 0
      %581 = vmatpush1.bf16.msra.mxu0 0
      %582 = vmatprep.subr.bf16.mxu0 0
      %583 = vmatpush1.bf16.msra.mxu0 0
      %584 = vmatprep.subr.bf16.mxu0 0
      %585 = vmatpush1.bf16.msra.mxu0 0
      %586 = vmatprep.subr.bf16.mxu0 0
      %587 = vmatpush1.bf16.msra.mxu0 0
      %588 = vmatprep.subr.bf16.mxu0 0
      %589 = vmatpush1.bf16.msra.mxu0 0
      %590 = vmatprep.subr.bf16.mxu0 0
      %591 = vmatpush1.bf16.msra.mxu0 0
      %592 = vmatprep.subr.bf16.mxu0 0
      %593 = vmatpush1.bf16.msra.mxu0 0
      %594 = vmatprep.mubr.bf16.mxu0 0
      %595 = vmatmul.mubr.bf16.gmra.mrb[0].mxu0 %v560
      %v596 = vpop.f32.mrb[0].mxu0
      %v597 = vadd.f32 0.0, %v596
      %v598 = vpop.f32.mrb[0].mxu0
      %v599 = vpop.f32.mrb[0].mxu0
      %v600 = vadd.f32 0.0, %v599
      %v601 = vpop.f32.mrb[0].mxu0
      %602 = vdwg.mxu0
      %v603 = vpack.c.bf16 %v600, %v597
      %s604 = scalar_lea.vmem %s2, 160
      %v605 = vld [vmem:[%s604] sm:$0xff]
      %v606 = vld [vmem:[%s604 + $0x8] sm:$0xff]
      %v607 = vld [vmem:[%s604 + $0x10] sm:$0xff]
      %v608 = vld [vmem:[%s604 + $0x18] sm:$0xff]
      %v613 = vunpack.c.l.b16 %v605
      %v614 = vunpack.c.h.b16 %v605
      %v615 = vunpack.c.l.b16 %v606
      %v616 = vunpack.c.h.b16 %v606
      %v617 = vunpack.c.l.b16 %v607
      %v618 = vunpack.c.h.b16 %v607
      %v619 = vunpack.c.l.b16 %v608
      %v620 = vunpack.c.h.b16 %v608
      %v621 = vpack.c.b16 %v615, %v613
      %v622 = vpack.c.b16 %v616, %v614
      %v623 = vpack.c.b16 %v619, %v617
      %v624 = vpack.c.b16 %v620, %v618
      %v630 = vsel %vm316, %v603, 0
      %632 = vmatprep.subr.bf16.mxu0 %v622
      %633 = vmatpush1.bf16.msra.mxu0 %v621
      %634 = vmatprep.subr.bf16.mxu0 %v624
      %635 = vmatpush1.bf16.msra.mxu0 %v623
      %636 = vmatprep.subr.bf16.mxu0 0
      %637 = vmatpush1.bf16.msra.mxu0 0
      %638 = vmatprep.subr.bf16.mxu0 0
      %639 = vmatpush1.bf16.msra.mxu0 0
      %640 = vmatprep.subr.bf16.mxu0 0
      %641 = vmatpush1.bf16.msra.mxu0 0
      %642 = vmatprep.subr.bf16.mxu0 0
      %643 = vmatpush1.bf16.msra.mxu0 0
      %644 = vmatprep.subr.bf16.mxu0 0
      %645 = vmatpush1.bf16.msra.mxu0 0
      %646 = vmatprep.subr.bf16.mxu0 0
      %647 = vmatpush1.bf16.msra.mxu0 0
      %648 = vmatprep.subr.bf16.mxu0 0
      %649 = vmatpush1.bf16.msra.mxu0 0
      %650 = vmatprep.subr.bf16.mxu0 0
      %651 = vmatpush1.bf16.msra.mxu0 0
      %652 = vmatprep.subr.bf16.mxu0 0
      %653 = vmatpush1.bf16.msra.mxu0 0
      %654 = vmatprep.subr.bf16.mxu0 0
      %655 = vmatpush1.bf16.msra.mxu0 0
      %656 = vmatprep.subr.bf16.mxu0 0
      %657 = vmatpush1.bf16.msra.mxu0 0
      %658 = vmatprep.subr.bf16.mxu0 0
      %659 = vmatpush1.bf16.msra.mxu0 0
      %660 = vmatprep.subr.bf16.mxu0 0
      %661 = vmatpush1.bf16.msra.mxu0 0
      %662 = vmatprep.subr.bf16.mxu0 0
      %663 = vmatpush1.bf16.msra.mxu0 0
      %664 = vmatprep.mubr.bf16.mxu0 0
      %665 = vmatmul.mubr.bf16.gmra.mrb[0].mxu0 %v630
      %v666 = vpop.f32.mrb[0].mxu0
      %v667 = vadd.f32 0.0, %v666
      %v668 = vpop.f32.mrb[0].mxu0
      %v669 = vadd.f32 0.0, %v668
      %v670 = vpop.f32.mrb[0].mxu0
      %v671 = vadd.f32 0.0, %v670
      %v672 = vpop.f32.mrb[0].mxu0
      %v673 = vadd.f32 0.0, %v672
      %674 = vdwg.mxu0
      %v675 = vadd.f32 %v550, %v667
      %v676 = vadd.f32 %v551, %v669
      %v677 = vadd.f32 %v552, %v671
      %v678 = vadd.f32 %v553, %v673
      %679 = vmatprep.subr.bf16.mxu0 0
      %680 = vmatpush1.bf16.msra.mxu0 %v290
      %681 = vmatprep.subr.bf16.mxu0 0
      %682 = vmatpush1.bf16.msra.mxu0 0
      %683 = vmatprep.subr.bf16.mxu0 0
      %684 = vmatpush1.bf16.msra.mxu0 0
      %685 = vmatprep.subr.bf16.mxu0 0
      %686 = vmatpush1.bf16.msra.mxu0 0
      %687 = vmatprep.subr.bf16.mxu0 0
      %688 = vmatpush1.bf16.msra.mxu0 0
      %689 = vmatprep.subr.bf16.mxu0 0
      %690 = vmatpush1.bf16.msra.mxu0 0
      %691 = vmatprep.subr.bf16.mxu0 0
      %692 = vmatpush1.bf16.msra.mxu0 0
      %693 = vmatprep.subr.bf16.mxu0 0
      %694 = vmatpush1.bf16.msra.mxu0 0
      %695 = vmatprep.subr.bf16.mxu0 0
      %696 = vmatpush1.bf16.msra.mxu0 0
      %697 = vmatprep.subr.bf16.mxu0 0
      %698 = vmatpush1.bf16.msra.mxu0 0
      %699 = vmatprep.subr.bf16.mxu0 0
      %700 = vmatpush1.bf16.msra.mxu0 0
      %701 = vmatprep.subr.bf16.mxu0 0
      %702 = vmatpush1.bf16.msra.mxu0 0
      %703 = vmatprep.subr.bf16.mxu0 0
      %704 = vmatpush1.bf16.msra.mxu0 0
      %705 = vmatprep.subr.bf16.mxu0 0
      %706 = vmatpush1.bf16.msra.mxu0 0
      %707 = vmatprep.subr.bf16.mxu0 0
      %708 = vmatpush1.bf16.msra.mxu0 0
      %709 = vmatprep.subr.bf16.mxu0 0
      %710 = vmatpush1.bf16.msra.mxu0 0
      %711 = vmatprep.mubr.bf16.mxu0 0
      %712 = vmatmul.mubr.bf16.gmra.mrb[0].mxu0 %v247
      %v713 = vpop.f32.mrb[0].mxu0
      %v714 = vadd.f32 0.0, %v713
      %v715 = vpop.f32.mrb[0].mxu0
      %v716 = vpop.f32.mrb[0].mxu0
      %v717 = vadd.f32 0.0, %v716
      %v718 = vpop.f32.mrb[0].mxu0
      %719 = vdwg.mxu0
      %v720 = vpack.c.bf16 %v717, %v714
      %s721 = scalar_lea.vmem %s2, 64
      %v722 = vld [vmem:[%s721] sm:$0xff]
      %v723 = vld [vmem:[%s721 + $0x8] sm:$0xff]
      %v724 = vld [vmem:[%s721 + $0x10] sm:$0xff]
      %v725 = vld [vmem:[%s721 + $0x18] sm:$0xff]
      %v730 = vunpack.c.l.b16 %v722
      %v731 = vunpack.c.h.b16 %v722
      %v732 = vunpack.c.l.b16 %v723
      %v733 = vunpack.c.h.b16 %v723
      %v734 = vunpack.c.l.b16 %v724
      %v735 = vunpack.c.h.b16 %v724
      %v736 = vunpack.c.l.b16 %v725
      %v737 = vunpack.c.h.b16 %v725
      %v738 = vpack.c.b16 %v732, %v730
      %v739 = vpack.c.b16 %v733, %v731
      %v740 = vpack.c.b16 %v736, %v734
      %v741 = vpack.c.b16 %v737, %v735
      %v747 = vsel %vm316, %v720, 0
      %749 = vmatprep.subr.bf16.mxu0 %v739
      %750 = vmatpush1.bf16.msra.mxu0 %v738
      %751 = vmatprep.subr.bf16.mxu0 %v741
      %752 = vmatpush1.bf16.msra.mxu0 %v740
      %753 = vmatprep.subr.bf16.mxu0 0
      %754 = vmatpush1.bf16.msra.mxu0 0
      %755 = vmatprep.subr.bf16.mxu0 0
      %756 = vmatpush1.bf16.msra.mxu0 0
      %757 = vmatprep.subr.bf16.mxu0 0
      %758 = vmatpush1.bf16.msra.mxu0 0
      %759 = vmatprep.subr.bf16.mxu0 0
      %760 = vmatpush1.bf16.msra.mxu0 0
      %761 = vmatprep.subr.bf16.mxu0 0
      %762 = vmatpush1.bf16.msra.mxu0 0
      %763 = vmatprep.subr.bf16.mxu0 0
      %764 = vmatpush1.bf16.msra.mxu0 0
      %765 = vmatprep.subr.bf16.mxu0 0
      %766 = vmatpush1.bf16.msra.mxu0 0
      %767 = vmatprep.subr.bf16.mxu0 0
      %768 = vmatpush1.bf16.msra.mxu0 0
      %769 = vmatprep.subr.bf16.mxu0 0
      %770 = vmatpush1.bf16.msra.mxu0 0
      %771 = vmatprep.subr.bf16.mxu0 0
      %772 = vmatpush1.bf16.msra.mxu0 0
      %773 = vmatprep.subr.bf16.mxu0 0
      %774 = vmatpush1.bf16.msra.mxu0 0
      %775 = vmatprep.subr.bf16.mxu0 0
      %776 = vmatpush1.bf16.msra.mxu0 0
      %777 = vmatprep.subr.bf16.mxu0 0
      %778 = vmatpush1.bf16.msra.mxu0 0
      %779 = vmatprep.subr.bf16.mxu0 0
      %780 = vmatpush1.bf16.msra.mxu0 0
      %781 = vmatprep.mubr.bf16.mxu0 0
      %782 = vmatmul.mubr.bf16.gmra.mrb[0].mxu0 %v747
      %v783 = vpop.f32.mrb[0].mxu0
      %v784 = vadd.f32 0.0, %v783
      %v785 = vpop.f32.mrb[0].mxu0
      %v786 = vadd.f32 0.0, %v785
      %v787 = vpop.f32.mrb[0].mxu0
      %v788 = vadd.f32 0.0, %v787
      %v789 = vpop.f32.mrb[0].mxu0
      %v790 = vadd.f32 0.0, %v789
      %791 = vdwg.mxu0
      %v792 = vadd.f32 %v675, %v784
      %v793 = vadd.f32 %v676, %v786
      %v794 = vadd.f32 %v677, %v788
      %v795 = vadd.f32 %v678, %v790
      %796 = vmatprep.subr.bf16.mxu0 0
      %797 = vmatpush1.bf16.msra.mxu0 %v478
      %798 = vmatprep.subr.bf16.mxu0 0
      %799 = vmatpush1.bf16.msra.mxu0 0
      %800 = vmatprep.subr.bf16.mxu0 0
      %801 = vmatpush1.bf16.msra.mxu0 0
      %802 = vmatprep.subr.bf16.mxu0 0
      %803 = vmatpush1.bf16.msra.mxu0 0
      %804 = vmatprep.subr.bf16.mxu0 0
      %805 = vmatpush1.bf16.msra.mxu0 0
      %806 = vmatprep.subr.bf16.mxu0 0
      %807 = vmatpush1.bf16.msra.mxu0 0
      %808 = vmatprep.subr.bf16.mxu0 0
      %809 = vmatpush1.bf16.msra.mxu0 0
      %810 = vmatprep.subr.bf16.mxu0 0
      %811 = vmatpush1.bf16.msra.mxu0 0
      %812 = vmatprep.subr.bf16.mxu0 0
      %813 = vmatpush1.bf16.msra.mxu0 0
      %814 = vmatprep.subr.bf16.mxu0 0
      %815 = vmatpush1.bf16.msra.mxu0 0
      %816 = vmatprep.subr.bf16.mxu0 0
      %817 = vmatpush1.bf16.msra.mxu0 0
      %818 = vmatprep.subr.bf16.mxu0 0
      %819 = vmatpush1.bf16.msra.mxu0 0
      %820 = vmatprep.subr.bf16.mxu0 0
      %821 = vmatpush1.bf16.msra.mxu0 0
      %822 = vmatprep.subr.bf16.mxu0 0
      %823 = vmatpush1.bf16.msra.mxu0 0
      %824 = vmatprep.subr.bf16.mxu0 0
      %825 = vmatpush1.bf16.msra.mxu0 0
      %826 = vmatprep.subr.bf16.mxu0 0
      %827 = vmatpush1.bf16.msra.mxu0 0
      %828 = vmatprep.mubr.bf16.mxu0 0
      %829 = vmatmul.mubr.bf16.gmra.mrb[0].mxu0 %v435
      %v830 = vpop.f32.mrb[0].mxu0
      %v831 = vadd.f32 0.0, %v830
      %v832 = vpop.f32.mrb[0].mxu0
      %v833 = vpop.f32.mrb[0].mxu0
      %v834 = vadd.f32 0.0, %v833
      %v835 = vpop.f32.mrb[0].mxu0
      %836 = vdwg.mxu0
      %v837 = vpack.c.bf16 %v834, %v831
      %s838 = scalar_lea.vmem %s2, 128
      %v839 = vld [vmem:[%s838] sm:$0xff]
      %v840 = vld [vmem:[%s838 + $0x8] sm:$0xff]
      %v841 = vld [vmem:[%s838 + $0x10] sm:$0xff]
      %v842 = vld [vmem:[%s838 + $0x18] sm:$0xff]
      %v847 = vunpack.c.l.b16 %v839
      %v848 = vunpack.c.h.b16 %v839
      %v849 = vunpack.c.l.b16 %v840
      %v850 = vunpack.c.h.b16 %v840
      %v851 = vunpack.c.l.b16 %v841
      %v852 = vunpack.c.h.b16 %v841
      %v853 = vunpack.c.l.b16 %v842
      %v854 = vunpack.c.h.b16 %v842
      %v855 = vpack.c.b16 %v849, %v847
      %v856 = vpack.c.b16 %v850, %v848
      %v857 = vpack.c.b16 %v853, %v851
      %v858 = vpack.c.b16 %v854, %v852
      %v864 = vsel %vm316, %v837, 0
      %866 = vmatprep.subr.bf16.mxu0 %v856
      %867 = vmatpush1.bf16.msra.mxu0 %v855
      %868 = vmatprep.subr.bf16.mxu0 %v858
      %869 = vmatpush1.bf16.msra.mxu0 %v857
      %870 = vmatprep.subr.bf16.mxu0 0
      %871 = vmatpush1.bf16.msra.mxu0 0
      %872 = vmatprep.subr.bf16.mxu0 0
      %873 = vmatpush1.bf16.msra.mxu0 0
      %874 = vmatprep.subr.bf16.mxu0 0
      %875 = vmatpush1.bf16.msra.mxu0 0
      %876 = vmatprep.subr.bf16.mxu0 0
      %877 = vmatpush1.bf16.msra.mxu0 0
      %878 = vmatprep.subr.bf16.mxu0 0
      %879 = vmatpush1.bf16.msra.mxu0 0
      %880 = vmatprep.subr.bf16.mxu0 0
      %881 = vmatpush1.bf16.msra.mxu0 0
      %882 = vmatprep.subr.bf16.mxu0 0
      %883 = vmatpush1.bf16.msra.mxu0 0
      %884 = vmatprep.subr.bf16.mxu0 0
      %885 = vmatpush1.bf16.msra.mxu0 0
      %886 = vmatprep.subr.bf16.mxu0 0
      %887 = vmatpush1.bf16.msra.mxu0 0
      %888 = vmatprep.subr.bf16.mxu0 0
      %889 = vmatpush1.bf16.msra.mxu0 0
      %890 = vmatprep.subr.bf16.mxu0 0
      %891 = vmatpush1.bf16.msra.mxu0 0
      %892 = vmatprep.subr.bf16.mxu0 0
      %893 = vmatpush1.bf16.msra.mxu0 0
      %894 = vmatprep.subr.bf16.mxu0 0
      %895 = vmatpush1.bf16.msra.mxu0 0
      %896 = vmatprep.subr.bf16.mxu0 0
      %897 = vmatpush1.bf16.msra.mxu0 0
      %898 = vmatprep.mubr.bf16.mxu0 0
      %899 = vmatmul.mubr.bf16.gmra.mrb[0].mxu0 %v864
      %v900 = vpop.f32.mrb[0].mxu0
      %v901 = vadd.f32 0.0, %v900
      %v902 = vpop.f32.mrb[0].mxu0
      %v903 = vadd.f32 0.0, %v902
      %v904 = vpop.f32.mrb[0].mxu0
      %v905 = vadd.f32 0.0, %v904
      %v906 = vpop.f32.mrb[0].mxu0
      %v907 = vadd.f32 0.0, %v906
      %908 = vdwg.mxu0
      %v909 = vadd.f32 %v792, %v901
      %v910 = vadd.f32 %v793, %v903
      %v911 = vadd.f32 %v794, %v905
      %v912 = vadd.f32 %v795, %v907
      %913 = vmatprep.subr.bf16.mxu0 0
      %914 = vmatpush1.bf16.msra.mxu0 %v603
      %915 = vmatprep.subr.bf16.mxu0 0
      %916 = vmatpush1.bf16.msra.mxu0 0
      %917 = vmatprep.subr.bf16.mxu0 0
      %918 = vmatpush1.bf16.msra.mxu0 0
      %919 = vmatprep.subr.bf16.mxu0 0
      %920 = vmatpush1.bf16.msra.mxu0 0
      %921 = vmatprep.subr.bf16.mxu0 0
      %922 = vmatpush1.bf16.msra.mxu0 0
      %923 = vmatprep.subr.bf16.mxu0 0
      %924 = vmatpush1.bf16.msra.mxu0 0
      %925 = vmatprep.subr.bf16.mxu0 0
      %926 = vmatpush1.bf16.msra.mxu0 0
      %927 = vmatprep.subr.bf16.mxu0 0
      %928 = vmatpush1.bf16.msra.mxu0 0
      %929 = vmatprep.subr.bf16.mxu0 0
      %930 = vmatpush1.bf16.msra.mxu0 0
      %931 = vmatprep.subr.bf16.mxu0 0
      %932 = vmatpush1.bf16.msra.mxu0 0
      %933 = vmatprep.subr.bf16.mxu0 0
      %934 = vmatpush1.bf16.msra.mxu0 0
      %935 = vmatprep.subr.bf16.mxu0 0
      %936 = vmatpush1.bf16.msra.mxu0 0
      %937 = vmatprep.subr.bf16.mxu0 0
      %938 = vmatpush1.bf16.msra.mxu0 0
      %939 = vmatprep.subr.bf16.mxu0 0
      %940 = vmatpush1.bf16.msra.mxu0 0
      %941 = vmatprep.subr.bf16.mxu0 0
      %942 = vmatpush1.bf16.msra.mxu0 0
      %943 = vmatprep.subr.bf16.mxu0 0
      %944 = vmatpush1.bf16.msra.mxu0 0
      %945 = vmatprep.mubr.bf16.mxu0 0
      %946 = vmatmul.mubr.bf16.gmra.mrb[0].mxu0 %v560
      %v947 = vpop.f32.mrb[0].mxu0
      %v948 = vadd.f32 0.0, %v947
      %v949 = vpop.f32.mrb[0].mxu0
      %v950 = vpop.f32.mrb[0].mxu0
      %v951 = vadd.f32 0.0, %v950
      %v952 = vpop.f32.mrb[0].mxu0
      %953 = vdwg.mxu0
      %v954 = vpack.c.bf16 %v951, %v948
      %s955 = scalar_lea.vmem %s2, 192
      %v956 = vld [vmem:[%s955] sm:$0xff]
      %v957 = vld [vmem:[%s955 + $0x8] sm:$0xff]
      %v958 = vld [vmem:[%s955 + $0x10] sm:$0xff]
      %v959 = vld [vmem:[%s955 + $0x18] sm:$0xff]
      %v964 = vunpack.c.l.b16 %v956
      %v965 = vunpack.c.h.b16 %v956
      %v966 = vunpack.c.l.b16 %v957
      %v967 = vunpack.c.h.b16 %v957
      %v968 = vunpack.c.l.b16 %v958
      %v969 = vunpack.c.h.b16 %v958
      %v970 = vunpack.c.l.b16 %v959
      %v971 = vunpack.c.h.b16 %v959
      %v972 = vpack.c.b16 %v966, %v964
      %v973 = vpack.c.b16 %v967, %v965
      %v974 = vpack.c.b16 %v970, %v968
      %v975 = vpack.c.b16 %v971, %v969
      %v981 = vsel %vm316, %v954, 0
      %983 = vmatprep.subr.bf16.mxu0 %v973
      %984 = vmatpush1.bf16.msra.mxu0 %v972
      %985 = vmatprep.subr.bf16.mxu0 %v975
      %986 = vmatpush1.bf16.msra.mxu0 %v974
      %987 = vmatprep.subr.bf16.mxu0 0
      %988 = vmatpush1.bf16.msra.mxu0 0
      %989 = vmatprep.subr.bf16.mxu0 0
      %990 = vmatpush1.bf16.msra.mxu0 0
      %991 = vmatprep.subr.bf16.mxu0 0
      %992 = vmatpush1.bf16.msra.mxu0 0
      %993 = vmatprep.subr.bf16.mxu0 0
      %994 = vmatpush1.bf16.msra.mxu0 0
      %995 = vmatprep.subr.bf16.mxu0 0
      %996 = vmatpush1.bf16.msra.mxu0 0
      %997 = vmatprep.subr.bf16.mxu0 0
      %998 = vmatpush1.bf16.msra.mxu0 0
      %999 = vmatprep.subr.bf16.mxu0 0
      %1000 = vmatpush1.bf16.msra.mxu0 0
      %1001 = vmatprep.subr.bf16.mxu0 0
      %1002 = vmatpush1.bf16.msra.mxu0 0
      %1003 = vmatprep.subr.bf16.mxu0 0
      %1004 = vmatpush1.bf16.msra.mxu0 0
      %1005 = vmatprep.subr.bf16.mxu0 0
      %1006 = vmatpush1.bf16.msra.mxu0 0
      %1007 = vmatprep.subr.bf16.mxu0 0
      %1008 = vmatpush1.bf16.msra.mxu0 0
      %1009 = vmatprep.subr.bf16.mxu0 0
      %1010 = vmatpush1.bf16.msra.mxu0 0
      %1011 = vmatprep.subr.bf16.mxu0 0
      %1012 = vmatpush1.bf16.msra.mxu0 0
      %1013 = vmatprep.subr.bf16.mxu0 0
      %1014 = vmatpush1.bf16.msra.mxu0 0
      %1015 = vmatprep.mubr.bf16.mxu0 0
      %1016 = vmatmul.mubr.bf16.gmra.mrb[0].mxu0 %v981
      %v1017 = vpop.f32.mrb[0].mxu0
      %v1018 = vadd.f32 0.0, %v1017
      %v1019 = vpop.f32.mrb[0].mxu0
      %v1020 = vadd.f32 0.0, %v1019
      %v1021 = vpop.f32.mrb[0].mxu0
      %v1022 = vadd.f32 0.0, %v1021
      %v1023 = vpop.f32.mrb[0].mxu0
      %v1024 = vadd.f32 0.0, %v1023
      %1025 = vdwg.mxu0
      %v1026 = vadd.f32 %v909, %v1018
      %v1027 = vadd.f32 %v910, %v1020
      %v1028 = vadd.f32 %v911, %v1022
      %v1029 = vadd.f32 %v912, %v1024
      %v1031 = vlaneseq
      %v1032 = vshrl.u32 %v1031, 7
      %v1033 = vsub.s32 0, %v1032
      %v1034 = vrot.slane %v221, %v1033
      %v1035 = vlaneseq
      %v1036 = vshrl.u32 %v1035, 7
      %v1037 = vsub.s32 1, %v1036
      %v1038 = vrot.slane %v221, %v1037
      %v1041 = vadd.f32 %v1026, %v1034
      %v1042 = vadd.f32 %v1027, %v1038
      %v1043 = vadd.f32 %v1028, %v1034
      %v1044 = vadd.f32 %v1029, %v1038
      %v1045 = vmax.f32 %v1041, 0.0
      %v1046 = vmax.f32 %v1042, 0.0
      %v1047 = vmax.f32 %v1043, 0.0
      %v1048 = vmax.f32 %v1044, 0.0
      %1049 = vst [vmem:[%s217] sm:$0xff] %v1045
      %1050 = vst [vmem:[%s217 + $0x8] sm:$0xff] %v1046
      %1051 = vst [vmem:[%s217 + $0x10] sm:$0xff] %v1047
      %1052 = vst [vmem:[%s217 + $0x18] sm:$0xff] %v1048
      %p1053 = scmp.lt.s32.totalorder %s15, 1
      %s1054 = scalar_select %p1053, %s15, 1
      %s1055 = smul.addr %s1054, 4
      %s1056 = smul.addr %s1055, 8
      %s1057 = scalar_lea.vmem %s4, %s1056
      // Predicated region
      $region37: #{_d_gcn_forward_impl.1} parent=35 // pred_check
        %p1058 = pneg %p127
      $region38: #{_d_gcn_forward_impl.1} parent=35 // pred_check_branch
        %1060 = sbr.rel (%p1058) target = $region40
      $region39: #{_d_gcn_forward_impl.1} parent=35 // pred_region
        _
      $region40: #{_d_gcn_forward_impl.1} parent=35 // pred_fallthru
        _
    $region36: #{_d_gcn_forward_impl.1} parent=5 // pred_fallthru
      _
    %p1061 = scmp.le.s32.totalorder 2, %s10
    // Predicated region
    $region41: #{_d_gcn_forward_impl.1} parent=5 // pred_check
      %p1062 = pneg %p1061
    $region42: #{_d_gcn_forward_impl.1} parent=5 // pred_check_branch
      %1064 = sbr.rel (%p1062) target = $region44
    $region43: #{_d_gcn_forward_impl.1} parent=5 // pred_region
      %s1065 = ssub.s32 %s10, 2
      // Predicated region
      $region45: #{_d_gcn_forward_impl.1} parent=43 // pred_check
        %p1066 = pneg %p133
      $region46: #{_d_gcn_forward_impl.1} parent=43 // pred_check_branch
        %1068 = sbr.rel (%p1066) target = $region48
      $region47: #{_d_gcn_forward_impl.1} parent=43 // pred_region
        %p1069 = scmp.lt.s32.totalorder %s16, 1
        %s1070 = scalar_select %p1069, %s16, 1
        %s1071 = smul.addr %s1070, 4
        %s1072 = smul.addr %s1071, 8
        %s1073 = scalar_lea.vmem %s4, %s1072
      $region48: #{_d_gcn_forward_impl.1} parent=43 // pred_fallthru
        _
    $region44: #{_d_gcn_forward_impl.1} parent=5 // pred_fallthru
      _
  $region6: #{_d_gcn_forward_impl.1} parent=0 // loop_footer
    %s14 = sadd.s32 1, %s10
  $region7: #{_d_gcn_forward_impl.1} parent=0 // loop_footer_branch
    %9 = sbr.rel target = $region3
  $region8: #{_d_gcn_forward_impl.1} parent=0 // loop_exit
    _

</llo_original>
